<compile_context>
chip_gen: v7x
topology: tpu7x:2x2x1
jax: 0.10.0
libtpu: 0.0.40
codegen_flags: <defaults>
</compile_context>

<pallas_src>
import jax
import jax.numpy as jnp
from jax.experimental import pallas as pl
from jax.experimental.pallas import tpu as pltpu

LANE = 128  # lane-dense output width (pad of action_dim + 2)


def _round_up(x, m):
    return ((x + m - 1) // m) * m


# ----------------------------------------------------------------------------
# Fused kernel: 3 MLP heads = 1 MXU dot + bias/ReLU + 1 MXU dot, all in VMEM.
# ----------------------------------------------------------------------------
def _fused_heads_kernel(x_ref, w1_ref, b1_ref, w2_ref, b2_ref, o_ref):
    # First layer: one K=(S+A) MXU pass into the packed (lane-aligned) hidden slab.
    h = jnp.dot(x_ref[...], w1_ref[...], preferred_element_type=jnp.float32)
    h = jnp.maximum(h + b1_ref[...], 0.0)                 # f32 bias + ReLU on VPU
    # Second layer: block-diagonal bf16 weights -> one lane-dense f32 output slab.
    y = jnp.dot(h.astype(w2_ref.dtype), w2_ref[...],
                preferred_element_type=jnp.float32) + b2_ref[...]
    o_ref[...] = y.astype(o_ref.dtype)


def fused_heads(x, w1, b1, w2, b2, *, block_b=512):
    """One pallas_call computing all three heads; returns (B, LANE) packed f32 output."""
    B, K = x.shape
    H3P = w1.shape[1]
    OUTP = w2.shape[1]

    # Batch tiling:
    #  * small B: one full-batch block (block_shape == array dim is always legal).
    #  * large B: big 128-aligned tiles, chosen so the grid has >= 2 steps
    #    (v7x has 2 TensorCores; a grid of 1 would idle one of them).
    if B <= 256:
        TB = B
    else:
        TB = min(block_b, _round_up(pl.cdiv(B, 2), 128))
    Bp = _round_up(B, TB)
    if Bp != B:
        x = jnp.pad(x, ((0, Bp - B), (0, 0)))

    # VMEM budget: double-buffered input/output tiles + resident weights/biases,
    # with headroom, clamped to stay safe on v7x (64 MiB physical VMEM).
    need = (2 * (TB * K * 2 + TB * OUTP * 4)        # in/out tiles, double-buffered
            + K * H3P * 2 + H3P * OUTP * 2          # resident bf16 weights
            + (H3P + OUTP) * 4)                     # resident f32 biases
    vmem_limit = min(max(4 * need, 32 * 1024 * 1024), 48 * 1024 * 1024)

    out = pl.pallas_call(
        _fused_heads_kernel,
        out_shape=jax.ShapeDtypeStruct((Bp, OUTP), jnp.float32),
        grid=(Bp // TB,),
        in_specs=[
            pl.BlockSpec((TB, K), lambda i: (i, 0)),       # [state, action] tile
            pl.BlockSpec((K, H3P), lambda i: (0, 0)),      # packed W1, resident
            pl.BlockSpec((1, H3P), lambda i: (0, 0)),      # packed b1, resident
            pl.BlockSpec((H3P, OUTP), lambda i: (0, 0)),   # block-diag W2, resident
            pl.BlockSpec((1, OUTP), lambda i: (0, 0)),     # packed b2, resident
        ],
        out_specs=pl.BlockSpec((TB, OUTP), lambda i: (i, 0)),
        compiler_params=pltpu.CompilerParams(
            dimension_semantics=("parallel",),
            vmem_limit_bytes=vmem_limit,
        ),
    )(x, w1, b1, w2, b2)
    return out[:B]


# ----------------------------------------------------------------------------
# Deterministic parameter construction + one-time packing for the fused kernel.
# ----------------------------------------------------------------------------
def _init_linear(key, d_in, d_out, dtype=jnp.float32):
    kw, kb = jax.random.split(key)
    scale = 1.0 / jnp.sqrt(jnp.asarray(d_in, jnp.float32))
    w = jax.random.uniform(kw, (d_in, d_out), dtype, -scale, scale)  # (d_in, d_out)
    b = jax.random.uniform(kb, (1, d_out), dtype, -scale, scale)
    return w, b


def make_params(key, state_dim, action_dim, hidden):
    keys = jax.random.split(key, 6)
    actor = (*_init_linear(keys[0], state_dim, hidden),
             *_init_linear(keys[1], hidden, action_dim))
    critic = (*_init_linear(keys[2], state_dim, hidden),
              *_init_linear(keys[3], hidden, 1))
    disc = (*_init_linear(keys[4], state_dim + action_dim, hidden),
            *_init_linear(keys[5], hidden, 1))
    return actor, critic, disc


def pack_params(params, state_dim, action_dim, hidden, out_pad=LANE,
                mxu_dtype=jnp.bfloat16):
    """Pack the 3 MLPs into fused-kernel operands (done once, outside the hot path)."""
    (aw1, ab1, aw2, ab2), (cw1, cb1, cw2, cb2), (dw1, db1, dw2, db2) = params
    H = hidden
    S, A = state_dim, action_dim
    H3 = 3 * H
    H3P = _round_up(H3, 128)                      # lane-aligned packed hidden width
    dw1_s, dw1_a = dw1[:S], dw1[S:]

    # First layer: single (S+A, H3P) slab; actor/critic action-rows are zero.
    w1 = jnp.zeros((S + A, H3P), jnp.float32)
    w1 = w1.at[:S, 0:H].set(aw1)
    w1 = w1.at[:S, H:2 * H].set(cw1)
    w1 = w1.at[:S, 2 * H:H3].set(dw1_s)
    w1 = w1.at[S:, 2 * H:H3].set(dw1_a)
    b1 = jnp.zeros((1, H3P), jnp.float32)
    b1 = b1.at[:, 0:H].set(ab1)
    b1 = b1.at[:, H:2 * H].set(cb1)
    b1 = b1.at[:, 2 * H:H3].set(db1)

    # Second layer: block-diagonal, padded to a lane-dense (H3P, 128) slab.
    w2 = jnp.zeros((H3P, out_pad), jnp.float32)
    w2 = w2.at[0:H, 0:action_dim].set(aw2)
    w2 = w2.at[H:2 * H, action_dim:action_dim + 1].set(cw2)
    w2 = w2.at[2 * H:H3, action_dim + 1:action_dim + 2].set(dw2)
    b2 = jnp.zeros((1, out_pad), jnp.float32)
    b2 = b2.at[:, 0:action_dim].set(ab2)
    b2 = b2.at[:, action_dim:action_dim + 1].set(cb2)
    b2 = b2.at[:, action_dim + 1:action_dim + 2].set(db2)

    # MXU operands in bf16; biases stay f32 (epilogue runs in f32 on the VPU).
    return w1.astype(mxu_dtype), b1, w2.astype(mxu_dtype), b2


# ----------------------------------------------------------------------------
# WrapperStateAction3.forward equivalent (single jit, single kernel launch).
# ----------------------------------------------------------------------------
@jax.jit
def wrapper_state_action3_forward(packed, state, action):
    w1, b1, w2, b2 = packed
    action_dim = action.shape[1]
    x = jnp.concatenate([state, action], axis=-1).astype(w1.dtype)  # (B, S+A) bf16
    out = fused_heads(x, w1, b1, w2, b2)                            # (B, 128) packed f32
    q1 = out[:, :action_dim]                                        # net_actor(state)
    q2 = out[:, action_dim:action_dim + 1]                          # net_critic(state)
    q3 = out[:, action_dim + 1:action_dim + 2]                      # net_discriminator(state, action)
    return (q1, q2, q3)


if __name__ == "__main__":
    B, STATE_DIM, ACTION_DIM, HIDDEN = 8, 32, 16, 64

    root = jax.random.PRNGKey(0)
    k_state, k_action, k_params = jax.random.split(root, 3)

    state = jax.random.normal(k_state, (B, STATE_DIM), jnp.float32)
    action = jax.random.normal(k_action, (B, ACTION_DIM), jnp.float32)
    raw_params = make_params(k_params, STATE_DIM, ACTION_DIM, HIDDEN)
    packed = pack_params(raw_params, STATE_DIM, ACTION_DIM, HIDDEN)

    q1, q2, q3 = jax.block_until_ready(
        wrapper_state_action3_forward(packed, state, action))

    assert q1.shape == (B, ACTION_DIM)
    assert q2.shape == (B, 1)
    assert q3.shape == (B, 1)

    # Reference 1: same bf16 weight/activation path as the kernel, f32 accumulation.
    # Validates the packing / block-diagonal layout tightly.
    def ref_mlp_bf16(x, w1, b1, w2, b2):
        h = jnp.dot(x.astype(jnp.bfloat16), w1.astype(jnp.bfloat16),
                    preferred_element_type=jnp.float32)
        h = jnp.maximum(h + b1, 0.0)
        return jnp.dot(h.astype(jnp.bfloat16), w2.astype(jnp.bfloat16),
                       preferred_element_type=jnp.float32) + b2

    xc = jnp.concatenate([state, action], axis=-1)
    r1 = ref_mlp_bf16(state, *raw_params[0])
    r2 = ref_mlp_bf16(state, *raw_params[1])
    r3 = ref_mlp_bf16(xc, *raw_params[2])
    assert jnp.allclose(q1, r1, atol=2e-2, rtol=2e-2)
    assert jnp.allclose(q2, r2, atol=2e-2, rtol=2e-2)
    assert jnp.allclose(q3, r3, atol=2e-2, rtol=2e-2)

    # Reference 2: pure f32 semantics check (loose tolerance due to bf16 MXU feed).
    def ref_mlp_f32(x, w1, b1, w2, b2):
        return jnp.maximum(x @ w1 + b1, 0.0) @ w2 + b2

    f1 = ref_mlp_f32(state, *raw_params[0])
    f2 = ref_mlp_f32(state, *raw_params[1])
    f3 = ref_mlp_f32(xc, *raw_params[2])
    assert jnp.allclose(q1, f1, atol=1e-1, rtol=1e-1)
    assert jnp.allclose(q2, f2, atol=1e-1, rtol=1e-1)
    assert jnp.allclose(q3, f3, atol=1e-1, rtol=1e-1)

    print("KERNEL_OK")
</pallas_src>

<mosaic_0001>
module attributes {stable_mosaic.version = 11 : i64} {
  func.func @_fused_heads_kernel(%arg0: i32, %arg1: memref<8x48xbf16, #tpu.memory_space<vmem>>, %arg2: memref<48x256xbf16, #tpu.memory_space<vmem>>, %arg3: memref<1x256xf32, #tpu.memory_space<vmem>>, %arg4: memref<256x128xbf16, #tpu.memory_space<vmem>>, %arg5: memref<1x128xf32, #tpu.memory_space<vmem>>, %arg6: memref<8x128xf32, #tpu.memory_space<vmem>>) attributes {dimension_semantics = [#tpu.dimension_semantics<parallel>], iteration_bounds = array<i64: 1>, scalar_prefetch = 0 : i64, scratch_operands = 0 : i64, tpu.core_type = #tpu.core_type<tc>, window_params = [{transform_indices = @transform_0, window_bounds = array<i64: 8, 48>}, {pipeline_mode = #tpu.pipeline_mode<synchronous>, transform_indices = @transform_1, window_bounds = array<i64: 48, 256>}, {pipeline_mode = #tpu.pipeline_mode<synchronous>, transform_indices = @transform_2, window_bounds = array<i64: 1, 256>}, {pipeline_mode = #tpu.pipeline_mode<synchronous>, transform_indices = @transform_3, window_bounds = array<i64: 256, 128>}, {pipeline_mode = #tpu.pipeline_mode<synchronous>, transform_indices = @transform_4, window_bounds = array<i64: 1, 128>}, {transform_indices = @transform_5, window_bounds = array<i64: 8, 128>}]} {
    %c0 = arith.constant 0 : index
    %c0_0 = arith.constant 0 : index
    %0 = vector.load %arg1[%c0, %c0_0] : memref<8x48xbf16, #tpu.memory_space<vmem>>, vector<8x48xbf16>
    %c0_1 = arith.constant 0 : index
    %c0_2 = arith.constant 0 : index
    %1 = vector.load %arg2[%c0_1, %c0_2] : memref<48x256xbf16, #tpu.memory_space<vmem>>, vector<48x256xbf16>
    %cst = arith.constant dense<0.000000e+00> : vector<8x256xf32>
    %2 = tpu.matmul %0, %1, %cst {dimension_numbers = #tpu.dot_dimension_numbers<[1], [0], [0], [1], [0, 0, 1, 1], [], []>} : vector<8x48xbf16>, vector<48x256xbf16>, vector<8x256xf32> -> vector<8x256xf32>
    %c0_3 = arith.constant 0 : index
    %c0_4 = arith.constant 0 : index
    %3 = vector.load %arg3[%c0_3, %c0_4] : memref<1x256xf32, #tpu.memory_space<vmem>>, vector<1x256xf32>
    %4 = vector.broadcast %3 : vector<1x256xf32> to vector<8x256xf32>
    %5 = arith.addf %2, %4 : vector<8x256xf32>
    %cst_5 = arith.constant 0.000000e+00 : f32
    %6 = vector.broadcast %cst_5 : f32 to vector<8x256xf32>
    %7 = arith.maximumf %5, %6 : vector<8x256xf32>
    %8 = arith.truncf %7 : vector<8x256xf32> to vector<8x256xbf16>
    %c0_6 = arith.constant 0 : index
    %c0_7 = arith.constant 0 : index
    %9 = vector.load %arg4[%c0_6, %c0_7] : memref<256x128xbf16, #tpu.memory_space<vmem>>, vector<256x128xbf16>
    %cst_8 = arith.constant dense<0.000000e+00> : vector<8x128xf32>
    %10 = tpu.matmul %8, %9, %cst_8 {dimension_numbers = #tpu.dot_dimension_numbers<[1], [0], [0], [1], [0, 0, 1, 1], [], []>} : vector<8x256xbf16>, vector<256x128xbf16>, vector<8x128xf32> -> vector<8x128xf32>
    %c0_9 = arith.constant 0 : index
    %c0_10 = arith.constant 0 : index
    %11 = vector.load %arg5[%c0_9, %c0_10] : memref<1x128xf32, #tpu.memory_space<vmem>>, vector<1x128xf32>
    %12 = vector.broadcast %11 : vector<1x128xf32> to vector<8x128xf32>
    %13 = arith.addf %10, %12 : vector<8x128xf32>
    %c0_11 = arith.constant 0 : index
    %c0_12 = arith.constant 0 : index
    %14 = vector.load %arg6[%c0_11, %c0_12] : memref<8x128xf32, #tpu.memory_space<vmem>>, vector<8x128xf32>
    tpu.vector_store %arg6[%c0_11, %c0_12], %13 {strides = array<i32>} : memref<8x128xf32, #tpu.memory_space<vmem>>, vector<8x128xf32>,
    return
  }
  func.func @transform_0(%arg0: i32) -> (i32, i32) {
    %c0_i32 = arith.constant 0 : i32
    %c0_i32_0 = arith.constant 0 : i32
    return %arg0, %c0_i32 : i32, i32
  }
  func.func @transform_1(%arg0: i32) -> (i32, i32) {
    %c0_i32 = arith.constant 0 : i32
    %c0_i32_0 = arith.constant 0 : i32
    %c0_i32_1 = arith.constant 0 : i32
    return %c0_i32, %c0_i32_0 : i32, i32
  }
  func.func @transform_2(%arg0: i32) -> (i32, i32) {
    %c0_i32 = arith.constant 0 : i32
    %c0_i32_0 = arith.constant 0 : i32
    %c0_i32_1 = arith.constant 0 : i32
    return %c0_i32, %c0_i32_0 : i32, i32
  }
  func.func @transform_3(%arg0: i32) -> (i32, i32) {
    %c0_i32 = arith.constant 0 : i32
    %c0_i32_0 = arith.constant 0 : i32
    %c0_i32_1 = arith.constant 0 : i32
    return %c0_i32, %c0_i32_0 : i32, i32
  }
  func.func @transform_4(%arg0: i32) -> (i32, i32) {
    %c0_i32 = arith.constant 0 : i32
    %c0_i32_0 = arith.constant 0 : i32
    %c0_i32_1 = arith.constant 0 : i32
    return %c0_i32, %c0_i32_0 : i32, i32
  }
  func.func @transform_5(%arg0: i32) -> (i32, i32) {
    %c0_i32 = arith.constant 0 : i32
    %c0_i32_0 = arith.constant 0 : i32
    return %arg0, %c0_i32 : i32, i32
  }
}

</mosaic_0001>

<llo_original>
// kernel: wrapper_state_action3_forward.1
$region0: #{wrapper_state_action3_forward.1}
  #allocation0 [shape = 'u32[]', space=smem, size = 0x4, offset = 0x4, fixed_abs, tag = 'smem constant byte address 0x4 - core index']
  #allocation1 [shape = 'u32[144,128]{1,0:T(1,128)}', space=vmem, size = 0x12000, scoped, tag = 'internal scratch']
  %s0 = inlined_call_operand.vmem [shape: bf16[8,48], index: 0, kind: input, shape index: {}]
  %s1 = inlined_call_operand.hbm [shape: bf16[48,256], index: 1, kind: input, shape index: {}]
  %s2 = inlined_call_operand.vmem [shape: f32[1,256], index: 2, kind: input, shape index: {}]
  %s3 = inlined_call_operand.hbm [shape: bf16[256,128], index: 3, kind: input, shape index: {}]
  %s4 = inlined_call_operand.vmem [shape: f32[1,128], index: 4, kind: input, shape index: {}]
  %s5 = inlined_call_operand.vmem [shape: f32[8,128], index: 5, kind: output, shape index: {}]
  %s6 = sld [smem:[#allocation0]]
  $region38: #{wrapper_state_action3_forward.1} parent=0
    _
  %s8 = ssub.s32 1, %s6
  %s9 = scalar_select 0, %s8, %s6
  $region1: #{wrapper_state_action3_forward.1} parent=0
    #allocation2 [shape = 'u8[24576]{0}', space=vmem, size = 0x6000, scoped, tag = 'input window, operand 1, single buffered']
    #allocation3 [shape = 's32[1]{0}', space=sflag, size = 0x4, scoped, tag = 'scoped memory for wrapper_state_action3_forward.1']
    #allocation4 [shape = 'u8[65536]{0}', space=vmem, size = 0x10000, scoped, tag = 'input window, operand 3, single buffered']
    #allocation5 [shape = 's32[1]{0}', space=sflag, size = 0x4, scoped, tag = 'scoped memory for wrapper_state_action3_forward.1']
    %10 = vsyncpa [#allocation3], 0
    %11 = vsyncpa [#allocation5], 0
    // Predicated region
    $region2: #{wrapper_state_action3_forward.1} parent=1 // pred_check
      _
    $region3: #{wrapper_state_action3_forward.1} parent=1 // pred_check_branch
      %13 = sbr.rel (0) target = $region5
    $region4: #{wrapper_state_action3_forward.1} parent=1 // pred_region
      _
    $region5: #{wrapper_state_action3_forward.1} parent=1 // pred_fallthru
      _
    // Predicated region
    $region6: #{wrapper_state_action3_forward.1} parent=1 // pred_check
      _
    $region7: #{wrapper_state_action3_forward.1} parent=1 // pred_check_branch
      %15 = sbr.rel (0) target = $region9
    $region8: #{wrapper_state_action3_forward.1} parent=1 // pred_region
      %s17 = ssub.s32 768, 768
      %18 = vsyncadd [#allocation3], %s17
      %s19 = sshll.u32 [#allocation2], 4
      %s20 = int_to_ptr.vmem [resolvable:$true] %s19
      %25 = dma.hbm_to_vmem [thread:$0]  %s1, 768, %s20, [#allocation3], 128, 128, 8
    $region9: #{wrapper_state_action3_forward.1} parent=1 // pred_fallthru
      _
    // Predicated region
    $region10: #{wrapper_state_action3_forward.1} parent=1 // pred_check
      _
    $region11: #{wrapper_state_action3_forward.1} parent=1 // pred_check_branch
      %27 = sbr.rel (0) target = $region13
    $region12: #{wrapper_state_action3_forward.1} parent=1 // pred_region
      _
    $region13: #{wrapper_state_action3_forward.1} parent=1 // pred_fallthru
      _
    // Predicated region
    $region14: #{wrapper_state_action3_forward.1} parent=1 // pred_check
      _
    $region15: #{wrapper_state_action3_forward.1} parent=1 // pred_check_branch
      %29 = sbr.rel (0) target = $region17
    $region16: #{wrapper_state_action3_forward.1} parent=1 // pred_region
      %s31 = ssub.s32 2048, 2048
      %32 = vsyncadd [#allocation5], %s31
      %s33 = sshll.u32 [#allocation4], 4
      %s34 = int_to_ptr.vmem [resolvable:$true] %s33
      %39 = dma.hbm_to_vmem [thread:$0]  %s3, 2048, %s34, [#allocation5], 64, 64, 4
    $region17: #{wrapper_state_action3_forward.1} parent=1 // pred_fallthru
      _
    // Predicated region
    $region18: #{wrapper_state_action3_forward.1} parent=1 // pred_check
      _
    $region19: #{wrapper_state_action3_forward.1} parent=1 // pred_check_branch
      %41 = sbr.rel (0) target = $region21
    $region20: #{wrapper_state_action3_forward.1} parent=1 // pred_region
      _
    $region21: #{wrapper_state_action3_forward.1} parent=1 // pred_fallthru
      _
    // Predicated region
    $region22: #{wrapper_state_action3_forward.1} parent=1 // pred_check
      _
    $region23: #{wrapper_state_action3_forward.1} parent=1 // pred_check_branch
      %43 = sbr.rel (0) target = $region25
    $region24: #{wrapper_state_action3_forward.1} parent=1 // pred_region
      %44 = dma.done [#allocation3], 768
    $region25: #{wrapper_state_action3_forward.1} parent=1 // pred_fallthru
      _
    // Predicated region
    $region26: #{wrapper_state_action3_forward.1} parent=1 // pred_check
      _
    $region27: #{wrapper_state_action3_forward.1} parent=1 // pred_check_branch
      %46 = sbr.rel (0) target = $region29
    $region28: #{wrapper_state_action3_forward.1} parent=1 // pred_region
      %47 = dma.done [#allocation5], 2048
    $region29: #{wrapper_state_action3_forward.1} parent=1 // pred_fallthru
      _
    %v49 = vld [vmem:[%s0] sm:$0xf]
    %v50 = vld [vmem:[#allocation2] sm:$0xff]
    %v51 = vld [vmem:[#allocation2 + $0x8] sm:$0xff]
    %v52 = vld [vmem:[#allocation2 + $0x10] sm:$0xff]
    %v53 = vld [vmem:[#allocation2 + $0x18] sm:$0xff]
    %v54 = vld [vmem:[#allocation2 + $0x20] sm:$0xff]
    %v55 = vld [vmem:[#allocation2 + $0x28] sm:$0xff]
    %v56 = vld [vmem:[%s2] sm:$0x3]
    %v58 = vlaneseq
    %v59 = vshrl.u32 %v58, 7
    %v60 = vsub.s32 0, %v59
    %v61 = vrot.slane %v56, %v60
    %v62 = vlaneseq
    %v63 = vshrl.u32 %v62, 7
    %v64 = vsub.s32 1, %v63
    %v65 = vrot.slane %v56, %v64
    %v74 = vunpack.c.l.b16 %v50
    %v75 = vunpack.c.h.b16 %v50
    %v76 = vunpack.c.l.b16 %v51
    %v77 = vunpack.c.h.b16 %v51
    %v78 = vunpack.c.l.b16 %v52
    %v79 = vunpack.c.h.b16 %v52
    %v80 = vunpack.c.l.b16 %v53
    %v81 = vunpack.c.h.b16 %v53
    %v82 = vunpack.c.l.b16 %v54
    %v83 = vunpack.c.h.b16 %v54
    %v84 = vunpack.c.l.b16 %v55
    %v85 = vunpack.c.h.b16 %v55
    %v86 = vpack.c.b16 %v76, %v74
    %v87 = vpack.c.b16 %v77, %v75
    %v88 = vpack.c.b16 %v80, %v78
    %v89 = vpack.c.b16 %v81, %v79
    %v90 = vpack.c.b16 %v84, %v82
    %v91 = vpack.c.b16 %v85, %v83
    %vm98 = vcmask 392192
    %v100 = vsel %vm98, %v49, 0
    %102 = vmatprep.subr.bf16.mxu0 %v87
    %103 = vmatpush1.bf16.msra.mxu0 %v86
    %104 = vmatprep.subr.bf16.mxu0 %v89
    %105 = vmatpush1.bf16.msra.mxu0 %v88
    %106 = vmatprep.subr.bf16.mxu0 %v91
    %107 = vmatpush1.bf16.msra.mxu0 %v90
    %108 = vmatprep.subr.bf16.mxu0 0
    %109 = vmatpush1.bf16.msra.mxu0 0
    %110 = vmatprep.subr.bf16.mxu0 0
    %111 = vmatpush1.bf16.msra.mxu0 0
    %112 = vmatprep.subr.bf16.mxu0 0
    %113 = vmatpush1.bf16.msra.mxu0 0
    %114 = vmatprep.subr.bf16.mxu0 0
    %115 = vmatpush1.bf16.msra.mxu0 0
    %116 = vmatprep.subr.bf16.mxu0 0
    %117 = vmatpush1.bf16.msra.mxu0 0
    %118 = vmatprep.subr.bf16.mxu0 0
    %119 = vmatpush1.bf16.msra.mxu0 0
    %120 = vmatprep.subr.bf16.mxu0 0
    %121 = vmatpush1.bf16.msra.mxu0 0
    %122 = vmatprep.subr.bf16.mxu0 0
    %123 = vmatpush1.bf16.msra.mxu0 0
    %124 = vmatprep.subr.bf16.mxu0 0
    %125 = vmatpush1.bf16.msra.mxu0 0
    %126 = vmatprep.subr.bf16.mxu0 0
    %127 = vmatpush1.bf16.msra.mxu0 0
    %128 = vmatprep.subr.bf16.mxu0 0
    %129 = vmatpush1.bf16.msra.mxu0 0
    %130 = vmatprep.subr.bf16.mxu0 0
    %131 = vmatpush1.bf16.msra.mxu0 0
    %132 = vmatprep.subr.bf16.mxu0 0
    %133 = vmatpush1.bf16.msra.mxu0 0
    %134 = vmatprep.mubr.bf16.mxu0 0
    %135 = vmatmul.mubr.bf16.gmra.mrb[0].mxu0 %v100
    %v136 = vpop.f32.mrb[0].mxu0
    %v137 = vadd.f32 %v61, %v136
    %v138 = vpop.f32.mrb[0].mxu0
    %v139 = vadd.f32 %v65, %v138
    %v140 = vpop.f32.mrb[0].mxu0
    %v141 = vpop.f32.mrb[0].mxu0
    %142 = vdwg.mxu0
    %v143 = vmax.f32 %v137, 0.0
    %v144 = vmax.f32 %v139, 0.0
    %v145 = vpack.c.bf16 %v143, %v143
    %v146 = vpack.c.bf16 %v144, %v144
    %v147 = vld [vmem:[#allocation4] sm:$0xf]
    %v148 = vld [vmem:[#allocation4 + $0x4] sm:$0xf]
    %v149 = vld [vmem:[#allocation4 + $0x8] sm:$0xf]
    %v150 = vld [vmem:[#allocation4 + $0xc] sm:$0xf]
    %v151 = vld [vmem:[#allocation4 + $0x10] sm:$0xf]
    %v152 = vld [vmem:[#allocation4 + $0x14] sm:$0xf]
    %v153 = vld [vmem:[#allocation4 + $0x18] sm:$0xf]
    %v154 = vld [vmem:[#allocation4 + $0x1c] sm:$0xf]
    %v155 = vld [vmem:[#allocation4 + $0x20] sm:$0xf]
    %v156 = vld [vmem:[#allocation4 + $0x24] sm:$0xf]
    %v157 = vld [vmem:[#allocation4 + $0x28] sm:$0xf]
    %v158 = vld [vmem:[#allocation4 + $0x2c] sm:$0xf]
    %v159 = vld [vmem:[#allocation4 + $0x30] sm:$0xf]
    %v160 = vld [vmem:[#allocation4 + $0x34] sm:$0xf]
    %v161 = vld [vmem:[#allocation4 + $0x38] sm:$0xf]
    %v162 = vld [vmem:[#allocation4 + $0x3c] sm:$0xf]
    %v163 = vld [vmem:[#allocation4 + $0x40] sm:$0xf]
    %v164 = vld [vmem:[#allocation4 + $0x44] sm:$0xf]
    %v165 = vld [vmem:[#allocation4 + $0x48] sm:$0xf]
    %v166 = vld [vmem:[#allocation4 + $0x4c] sm:$0xf]
    %v167 = vld [vmem:[#allocation4 + $0x50] sm:$0xf]
    %v168 = vld [vmem:[#allocation4 + $0x54] sm:$0xf]
    %v169 = vld [vmem:[#allocation4 + $0x58] sm:$0xf]
    %v170 = vld [vmem:[#allocation4 + $0x5c] sm:$0xf]
    %v171 = vld [vmem:[#allocation4 + $0x60] sm:$0xf]
    %v172 = vld [vmem:[#allocation4 + $0x64] sm:$0xf]
    %v173 = vld [vmem:[#allocation4 + $0x68] sm:$0xf]
    %v174 = vld [vmem:[#allocation4 + $0x6c] sm:$0xf]
    %v175 = vld [vmem:[#allocation4 + $0x70] sm:$0xf]
    %v176 = vld [vmem:[#allocation4 + $0x74] sm:$0xf]
    %v177 = vld [vmem:[#allocation4 + $0x78] sm:$0xf]
    %v178 = vld [vmem:[#allocation4 + $0x7c] sm:$0xf]
    %v179 = vld [vmem:[%s4] sm:$0x1]
    %v181 = vlaneseq
    %v182 = vshrl.u32 %v181, 7
    %v183 = vsub.s32 0, %v182
    %v184 = vrot.slane %v179, %v183
    %v218 = vunpack.c.l.b16 %v147
    %v219 = vunpack.c.l.b16 %v148
    %v220 = vunpack.c.l.b16 %v149
    %v221 = vunpack.c.l.b16 %v150
    %v222 = vunpack.c.l.b16 %v151
    %v223 = vunpack.c.l.b16 %v152
    %v224 = vunpack.c.l.b16 %v153
    %v225 = vunpack.c.l.b16 %v154
    %v226 = vunpack.c.l.b16 %v155
    %v227 = vunpack.c.l.b16 %v156
    %v228 = vunpack.c.l.b16 %v157
    %v229 = vunpack.c.l.b16 %v158
    %v230 = vunpack.c.l.b16 %v159
    %v231 = vunpack.c.l.b16 %v160
    %v232 = vunpack.c.l.b16 %v161
    %v233 = vunpack.c.l.b16 %v162
    %v234 = vunpack.c.l.b16 %v163
    %v235 = vunpack.c.l.b16 %v164
    %v236 = vunpack.c.l.b16 %v165
    %v237 = vunpack.c.l.b16 %v166
    %v238 = vunpack.c.l.b16 %v167
    %v239 = vunpack.c.l.b16 %v168
    %v240 = vunpack.c.l.b16 %v169
    %v241 = vunpack.c.l.b16 %v170
    %v242 = vunpack.c.l.b16 %v171
    %v243 = vunpack.c.l.b16 %v172
    %v244 = vunpack.c.l.b16 %v173
    %v245 = vunpack.c.l.b16 %v174
    %v246 = vunpack.c.l.b16 %v175
    %v247 = vunpack.c.l.b16 %v176
    %v248 = vunpack.c.l.b16 %v177
    %v249 = vunpack.c.l.b16 %v178
    %v250 = vpack.c.b16 %v219, %v218
    %v251 = vpack.c.b16 %v221, %v220
    %v252 = vpack.c.b16 %v223, %v222
    %v253 = vpack.c.b16 %v225, %v224
    %v254 = vpack.c.b16 %v227, %v226
    %v255 = vpack.c.b16 %v229, %v228
    %v256 = vpack.c.b16 %v231, %v230
    %v257 = vpack.c.b16 %v233, %v232
    %v258 = vpack.c.b16 %v235, %v234
    %v259 = vpack.c.b16 %v237, %v236
    %v260 = vpack.c.b16 %v239, %v238
    %v261 = vpack.c.b16 %v241, %v240
    %v262 = vpack.c.b16 %v243, %v242
    %v263 = vpack.c.b16 %v245, %v244
    %v264 = vpack.c.b16 %v247, %v246
    %v265 = vpack.c.b16 %v249, %v248
    %282 = vmatprep.subr.bf16.mxu0 0
    %283 = vmatpush1.bf16.msra.mxu0 %v250
    %284 = vmatprep.subr.bf16.mxu0 0
    %285 = vmatpush1.bf16.msra.mxu0 %v251
    %286 = vmatprep.subr.bf16.mxu0 0
    %287 = vmatpush1.bf16.msra.mxu0 %v252
    %288 = vmatprep.subr.bf16.mxu0 0
    %289 = vmatpush1.bf16.msra.mxu0 %v253
    %290 = vmatprep.subr.bf16.mxu0 0
    %291 = vmatpush1.bf16.msra.mxu0 %v254
    %292 = vmatprep.subr.bf16.mxu0 0
    %293 = vmatpush1.bf16.msra.mxu0 %v255
    %294 = vmatprep.subr.bf16.mxu0 0
    %295 = vmatpush1.bf16.msra.mxu0 %v256
    %296 = vmatprep.subr.bf16.mxu0 0
    %297 = vmatpush1.bf16.msra.mxu0 %v257
    %298 = vmatprep.subr.bf16.mxu0 0
    %299 = vmatpush1.bf16.msra.mxu0 %v258
    %300 = vmatprep.subr.bf16.mxu0 0
    %301 = vmatpush1.bf16.msra.mxu0 %v259
    %302 = vmatprep.subr.bf16.mxu0 0
    %303 = vmatpush1.bf16.msra.mxu0 %v260
    %304 = vmatprep.subr.bf16.mxu0 0
    %305 = vmatpush1.bf16.msra.mxu0 %v261
    %306 = vmatprep.subr.bf16.mxu0 0
    %307 = vmatpush1.bf16.msra.mxu0 %v262
    %308 = vmatprep.subr.bf16.mxu0 0
    %309 = vmatpush1.bf16.msra.mxu0 %v263
    %310 = vmatprep.subr.bf16.mxu0 0
    %311 = vmatpush1.bf16.msra.mxu0 %v264
    %312 = vmatprep.subr.bf16.mxu0 0
    %313 = vmatpush1.bf16.msra.mxu0 %v265
    %314 = vmatprep.mubr.bf16.mxu0 %v146
    %315 = vmatmul.mubr.bf16.gmra.mrb[0].mxu0 %v145
    %v316 = vpop.f32.mrb[0].mxu0
    %v317 = vadd.f32 %v184, %v316
    %v318 = vpop.f32.mrb[0].mxu0
    %v319 = vpop.f32.mrb[0].mxu0
    %v320 = vpop.f32.mrb[0].mxu0
    %321 = vdwg.mxu0
    %322 = vst [vmem:[%s5] sm:$0xff] %v317
    // Predicated region
    $region30: #{wrapper_state_action3_forward.1} parent=1 // pred_check
      _
    $region31: #{wrapper_state_action3_forward.1} parent=1 // pred_check_branch
      %324 = sbr.rel (0) target = $region33
    $region32: #{wrapper_state_action3_forward.1} parent=1 // pred_region
      _
    $region33: #{wrapper_state_action3_forward.1} parent=1 // pred_fallthru
      _
    // Predicated region
    $region34: #{wrapper_state_action3_forward.1} parent=1 // pred_check
      _
    $region35: #{wrapper_state_action3_forward.1} parent=1 // pred_check_branch
      %326 = sbr.rel (0) target = $region37
    $region36: #{wrapper_state_action3_forward.1} parent=1 // pred_region
      _
    $region37: #{wrapper_state_action3_forward.1} parent=1 // pred_fallthru
      _
    %327 = vsyncpa [#allocation3], 1
    %328 = vsyncpa [#allocation5], 1

</llo_original>
